<compile_context>
chip_gen: v5e
topology: v5e:2x2
jax: 0.10.0
libtpu: 0.0.40
codegen_flags: <defaults>
</compile_context>

<pallas_src>
import functools

import jax
import jax.numpy as jnp
from jax.experimental import pallas as pl
from jax.experimental.pallas import tpu as pltpu


def _round_up(x, m):
    return ((x + m - 1) // m) * m


def _round_down(x, m):
    return (x // m) * m


def _focal_loss_kernel(n_ref, x_ref, t_ref, a_ref, o_ref, *, gamma):
    i = pl.program_id(0)

    x = x_ref[...]                       # (tile_n, C) f32 logits
    t = t_ref[...]                       # (tile_n, 1) i32 target class ids
    a = a_ref[...]                       # (1, C)      f32 per-class alpha
    tn, c = x.shape

    # One-hot class mask built from a lane iota (replaces scatter_).
    cls = jax.lax.broadcasted_iota(jnp.int32, (tn, c), 1)
    onehot = (cls == t).astype(jnp.float32)                 # (tile_n, C)

    # Target logit and per-row alpha gathered in the same masked pass.
    x_t = jnp.sum(x * onehot, axis=1, keepdims=True)        # (tile_n, 1)
    alpha_t = jnp.sum(a * onehot, axis=1, keepdims=True)    # (tile_n, 1)

    # log softmax at the target class via log-sum-exp.
    m = jnp.max(x, axis=1, keepdims=True)
    lse = m + jnp.log(jnp.sum(jnp.exp(x - m), axis=1, keepdims=True))
    log_p = x_t - lse                                       # <= 0
    p_t = jnp.exp(log_p)

    one_minus = jnp.maximum(1.0 - p_t, 0.0)
    g = float(gamma)
    if g.is_integer() and 0.0 <= g <= 8.0:
        focal = jnp.ones_like(one_minus)
        for _ in range(int(g)):                             # exact VPU multiplies
            focal = focal * one_minus
    else:
        focal = one_minus ** g                              # non-integer gamma only

    per_row = -alpha_t * focal * log_p                      # (tile_n, 1)

    # Mask out the ragged tail rows with a select (NaN/Inf-proof; the
    # out-of-bounds rows of the last block contain unspecified data).
    row = jax.lax.broadcasted_iota(jnp.int32, (tn, 1), 0)
    valid = (i * tn + row) < n_ref[0]
    per_row = jnp.where(valid, per_row, 0.0)

    partial = jnp.sum(per_row)                              # tile partial sum
    o_ref[...] = jnp.broadcast_to(partial, o_ref.shape).astype(o_ref.dtype)


def focal_loss(inputs, targets, alpha=None, gamma=2.0, size_average=True,
               block_bytes=2 << 20):
    """inputs: (N, C) float logits; targets: (N,) int class ids; alpha: (C,)."""
    inputs = jnp.asarray(inputs, jnp.float32)
    n, c = inputs.shape
    if alpha is None:
        alpha = jnp.ones((c,), dtype=jnp.float32)           # torch.ones(class_num, 1)
    alpha_row = jnp.asarray(alpha, jnp.float32).reshape(1, c)
    targets_col = jnp.asarray(targets, jnp.int32).reshape(n, 1)

    # Byte-budgeted batch tile.  VMEM row cost includes 128-lane padding.
    cpad = _round_up(c, 128)
    row_bytes = cpad * 4                                    # f32 logits row in VMEM
    tile_n = max(8, _round_down(int(block_bytes) // row_bytes, 8))
    if n >= 8:
        tile_n = min(tile_n, _round_down(n, 8))             # multiple of 8, <= N
    else:
        tile_n = n                                          # tiny batch: one full block
    num_tiles = (n + tile_n - 1) // tile_n

    # Double-buffered logits + targets (targets (tile_n,1) i32 also pads to
    # 128 lanes) + resident alpha + output blocks; 2x headroom, 48 MiB cap
    # (v7x has 64 MiB physical VMEM per TensorCore).
    vmem_needed = 2 * tile_n * (row_bytes + 128 * 4) + row_bytes + 2 * 8 * 128 * 4
    vmem_limit = int(min(max(2 * vmem_needed, 16 << 20), 48 << 20))

    kernel = functools.partial(_focal_loss_kernel, gamma=float(gamma))

    cost = pl.CostEstimate(
        flops=8 * n * c,
        transcendentals=n * c + 3 * n,
        bytes_accessed=n * c * 4 + n * 4 + c * 4 + num_tiles * 8 * 128 * 4,
    )

    partials = pl.pallas_call(
        kernel,
        out_shape=jax.ShapeDtypeStruct((num_tiles, 8, 128), jnp.float32),
        grid_spec=pltpu.PrefetchScalarGridSpec(
            num_scalar_prefetch=1,                           # n (true batch size) in SMEM
            grid=(num_tiles,),
            in_specs=[
                pl.BlockSpec((tile_n, c), lambda i, n_s: (i, 0)),  # logits, tiled over N
                pl.BlockSpec((tile_n, 1), lambda i, n_s: (i, 0)),  # targets, tiled over N
                pl.BlockSpec((1, c), lambda i, n_s: (0, 0)),       # alpha, resident
            ],
            out_specs=pl.BlockSpec((1, 8, 128), lambda i, n_s: (i, 0, 0)),
        ),
        compiler_params=pltpu.CompilerParams(
            dimension_semantics=("parallel",),               # no carried state -> megacore OK
            vmem_limit_bytes=vmem_limit,
        ),
        cost_estimate=cost,
    )(jnp.array([n], dtype=jnp.int32), inputs, targets_col, alpha_row)

    total = jnp.sum(partials[:, 0, 0])                       # reduce per-tile partials
    if size_average:
        total = total / jnp.float32(n)
    return total


if __name__ == "__main__":
    key = jax.random.PRNGKey(0)
    k1, k2, k3 = jax.random.split(key, 3)

    # batch=70 (deliberately not a multiple of 8 or of the tile), class_num=16
    N, C = 70, 16
    inputs = jax.random.normal(k1, (N, C), dtype=jnp.float32)
    targets = jax.random.randint(k2, (N,), 0, C, dtype=jnp.int32)
    alpha = jax.random.uniform(k3, (C,), minval=0.5, maxval=1.5, dtype=jnp.float32)

    loss = focal_loss(inputs, targets, alpha=alpha, gamma=2.0, size_average=True)
    jax.block_until_ready(loss)

    # plain-JAX reference
    p = jax.nn.softmax(inputs, axis=1)
    pt = p[jnp.arange(N), targets]
    at = alpha[targets]
    ref_mean = jnp.mean(-at * (1.0 - pt) ** 2 * jnp.log(pt))
    assert jnp.allclose(loss, ref_mean, rtol=1e-5, atol=1e-6), (loss, ref_mean)

    # also check size_average=False with default alpha (= ones)
    loss_sum = focal_loss(inputs, targets, alpha=None, gamma=2.0,
                          size_average=False)
    jax.block_until_ready(loss_sum)
    ref_sum = jnp.sum(-(1.0 - pt) ** 2 * jnp.log(pt))
    assert jnp.allclose(loss_sum, ref_sum, rtol=1e-5, atol=1e-5), (loss_sum, ref_sum)

    print("KERNEL_OK")
</pallas_src>

<mosaic_0001>
module attributes {stable_mosaic.version = 11 : i64} {
  func.func @_focal_loss_kernel(%arg0: i32, %arg1: memref<1xi32, #tpu.memory_space<smem>>, %arg2: memref<64x16xf32, #tpu.memory_space<vmem>>, %arg3: memref<64x1xi32, #tpu.memory_space<vmem>>, %arg4: memref<1x16xf32, #tpu.memory_space<vmem>>, %arg5: memref<1x8x128xf32, #tpu.memory_space<vmem>>) attributes {dimension_semantics = [#tpu.dimension_semantics<parallel>], iteration_bounds = array<i64: 2>, scalar_prefetch = 1 : i64, scratch_operands = 0 : i64, tpu.core_type = #tpu.core_type<tc>, window_params = [{transform_indices = @transform_0, window_bounds = array<i64: 64, 16>}, {transform_indices = @transform_1, window_bounds = array<i64: 64, 1>}, {pipeline_mode = #tpu.pipeline_mode<synchronous>, transform_indices = @transform_2, window_bounds = array<i64: 1, 16>}, {transform_indices = @transform_3, window_bounds = array<i64: 1, 8, 128>}]} {
    %c0 = arith.constant 0 : index
    %c0_0 = arith.constant 0 : index
    %0 = vector.load %arg2[%c0, %c0_0] : memref<64x16xf32, #tpu.memory_space<vmem>>, vector<64x16xf32>
    %c0_1 = arith.constant 0 : index
    %c0_2 = arith.constant 0 : index
    %1 = vector.load %arg3[%c0_1, %c0_2] : memref<64x1xi32, #tpu.memory_space<vmem>>, vector<64x1xi32>
    %c0_3 = arith.constant 0 : index
    %c0_4 = arith.constant 0 : index
    %2 = vector.load %arg4[%c0_3, %c0_4] : memref<1x16xf32, #tpu.memory_space<vmem>>, vector<1x16xf32>
    %3 = tpu.iota {dimensions = array<i32: 1>} : vector<64x16xi32>
    %4 = vector.broadcast %1 : vector<64x1xi32> to vector<64x16xi32>
    %5 = arith.cmpi eq, %3, %4 : vector<64x16xi32>
    %6 = arith.extui %5 : vector<64x16xi1> to vector<64x16xi32>
    %7 = arith.sitofp %6 : vector<64x16xi32> to vector<64x16xf32>
    %8 = arith.mulf %0, %7 : vector<64x16xf32>
    %cst = arith.constant dense<0.000000e+00> : vector<64xf32>
    %9 = vector.multi_reduction <add>, %8, %cst [1] : vector<64x16xf32> to vector<64xf32>
    %10 = vector.shape_cast %9 : vector<64xf32> to vector<64x1xf32>
    %11 = vector.broadcast %2 : vector<1x16xf32> to vector<64x16xf32>
    %12 = arith.mulf %11, %7 : vector<64x16xf32>
    %cst_5 = arith.constant dense<0.000000e+00> : vector<64xf32>
    %13 = vector.multi_reduction <add>, %12, %cst_5 [1] : vector<64x16xf32> to vector<64xf32>
    %14 = vector.shape_cast %13 : vector<64xf32> to vector<64x1xf32>
    %cst_6 = arith.constant dense<0xFF800000> : vector<64xf32>
    %15 = vector.multi_reduction <maximumf>, %0, %cst_6 [1] : vector<64x16xf32> to vector<64xf32>
    %16 = vector.shape_cast %15 : vector<64xf32> to vector<64x1xf32>
    %17 = vector.broadcast %16 : vector<64x1xf32> to vector<64x16xf32>
    %18 = arith.subf %0, %17 : vector<64x16xf32>
    %19 = math.exp %18 : vector<64x16xf32>
    %cst_7 = arith.constant dense<0.000000e+00> : vector<64xf32>
    %20 = vector.multi_reduction <add>, %19, %cst_7 [1] : vector<64x16xf32> to vector<64xf32>
    %21 = vector.shape_cast %20 : vector<64xf32> to vector<64x1xf32>
    %22 = math.log %21 : vector<64x1xf32>
    %23 = arith.addf %16, %22 : vector<64x1xf32>
    %24 = arith.subf %10, %23 : vector<64x1xf32>
    %25 = math.exp %24 : vector<64x1xf32>
    %cst_8 = arith.constant 1.000000e+00 : f32
    %26 = vector.broadcast %cst_8 : f32 to vector<64x1xf32>
    %27 = arith.subf %26, %25 : vector<64x1xf32>
    %cst_9 = arith.constant 0.000000e+00 : f32
    %28 = vector.broadcast %cst_9 : f32 to vector<64x1xf32>
    %29 = arith.maximumf %27, %28 : vector<64x1xf32>
    %cst_10 = arith.constant 1.000000e+00 : f32
    %30 = vector.broadcast %cst_10 : f32 to vector<64x1xf32>
    %31 = arith.mulf %30, %29 : vector<64x1xf32>
    %32 = arith.mulf %31, %29 : vector<64x1xf32>
    %cst_11 = arith.constant 0.000000e+00 : f32
    %33 = vector.broadcast %cst_11 : f32 to vector<64x1xf32>
    %34 = arith.subf %33, %14 : vector<64x1xf32>
    %35 = arith.mulf %34, %32 : vector<64x1xf32>
    %36 = arith.mulf %35, %24 : vector<64x1xf32>
    %37 = tpu.iota {dimensions = array<i32: 0>} : vector<64x1xi32>
    %c64_i32 = arith.constant 64 : i32
    %38 = arith.muli %arg0, %c64_i32 : i32
    %39 = vector.broadcast %38 : i32 to vector<64x1xi32>
    %40 = arith.addi %39, %37 : vector<64x1xi32>
    %c0_12 = arith.constant 0 : index
    %41 = memref.load %arg1[%c0_12] : memref<1xi32, #tpu.memory_space<smem>>
    %42 = vector.broadcast %41 : i32 to vector<64x1xi32>
    %43 = arith.cmpi slt, %40, %42 : vector<64x1xi32>
    %cst_13 = arith.constant 0.000000e+00 : f32
    %44 = vector.broadcast %cst_13 : f32 to vector<64x1xf32>
    %45 = arith.select %43, %36, %44 : vector<64x1xi1>, vector<64x1xf32>
    %46 = vector.shape_cast %45 : vector<64x1xf32> to vector<1x64x1xf32>
    %cst_14 = arith.constant dense<0.000000e+00> : vector<1xf32>
    %47 = vector.multi_reduction <add>, %46, %cst_14 [1, 2] : vector<1x64x1xf32> to vector<1xf32>
    %48 = vector.shape_cast %47 : vector<1xf32> to vector<1x1x1xf32>
    %49 = vector.extract %48[0, 0, 0] : f32 from vector<1x1x1xf32>
    %50 = vector.broadcast %49 : f32 to vector<1x8x128xf32>
    %c0_15 = arith.constant 0 : index
    %c0_16 = arith.constant 0 : index
    %c0_17 = arith.constant 0 : index
    %51 = vector.load %arg5[%c0_15, %c0_16, %c0_17] : memref<1x8x128xf32, #tpu.memory_space<vmem>>, vector<1x8x128xf32>
    tpu.vector_store %arg5[%c0_15, %c0_16, %c0_17], %50 {strides = array<i32>} : memref<1x8x128xf32, #tpu.memory_space<vmem>>, vector<1x8x128xf32>,
    return
  }
  func.func @transform_0(%arg0: i32, %arg1: memref<1xi32, #tpu.memory_space<smem>>) -> (i32, i32) {
    %c0_i32 = arith.constant 0 : i32
    %c0_i32_0 = arith.constant 0 : i32
    return %arg0, %c0_i32 : i32, i32
  }
  func.func @transform_1(%arg0: i32, %arg1: memref<1xi32, #tpu.memory_space<smem>>) -> (i32, i32) {
    %c0_i32 = arith.constant 0 : i32
    %c0_i32_0 = arith.constant 0 : i32
    return %arg0, %c0_i32 : i32, i32
  }
  func.func @transform_2(%arg0: i32, %arg1: memref<1xi32, #tpu.memory_space<smem>>) -> (i32, i32) {
    %c0_i32 = arith.constant 0 : i32
    %c0_i32_0 = arith.constant 0 : i32
    %c0_i32_1 = arith.constant 0 : i32
    return %c0_i32, %c0_i32_0 : i32, i32
  }
  func.func @transform_3(%arg0: i32, %arg1: memref<1xi32, #tpu.memory_space<smem>>) -> (i32, i32, i32) {
    %c0_i32 = arith.constant 0 : i32
    %c0_i32_0 = arith.constant 0 : i32
    %c0_i32_1 = arith.constant 0 : i32
    return %arg0, %c0_i32, %c0_i32_0 : i32, i32, i32
  }
}

</mosaic_0001>

<llo_original>
// kernel: tpu_custom_call.1
$region0: #{tpu_custom_call.1}
  #allocation0 [shape = 'u32[]', space=smem, size = 0x4, offset = 0x4, fixed_abs, tag = 'smem constant byte address 0x4 - core index']
  #allocation1 [shape = 'u32[72,128]{1,0:T(1,128)}', space=vmem, size = 0x9000, scoped, tag = 'internal scratch']
  #allocation2 [shape = 's32[1]{0}', space=sflag, size = 0x4, scoped, tag = 'scoped memory for tpu_custom_call.1']
  #allocation3 [shape = 's32[1]{0:T(128)S(6)}', space=smem, size = 0x200, scoped, tag = 'prefetched SMEM operand 0']
  %s0 = inlined_call_operand.<no memory space> [shape: s32[1], index: 0, kind: input, shape index: {}]
  %s1 = inlined_call_operand.vmem [shape: f32[70,16], index: 1, kind: input, shape index: {}]
  %s2 = inlined_call_operand.vmem [shape: s32[70,1], index: 2, kind: input, shape index: {}]
  %s3 = inlined_call_operand.vmem [shape: f32[1,16], index: 3, kind: input, shape index: {}]
  %s4 = inlined_call_operand.hbm [shape: f32[2,8,128], index: 4, kind: output, shape index: {}]
  %s5 = sld [smem:[#allocation0]]
  $region45: #{tpu_custom_call.1} parent=0
    _
  %s7 = ssub.s32 1, %s5
  %s8 = scalar_select 0, %s7, %s5
  %9 = sst [smem:[#allocation3]] %s0
  $region1: #{tpu_custom_call.1} parent=0
    #allocation4 [shape = 'u8[8192]{0}', space=vmem, size = 0x2000, scoped, tag = 'output window, operand 0']
    #allocation5 [shape = 's32[2]{0}', space=sflag, size = 0x8, scoped, tag = 'scoped memory for tpu_custom_call.1']
    %10 = vsyncpa [#allocation5], 0
    %s11 = scalar_lea.sflag [#allocation5], 1
    %12 = vsyncpa %s11, 0
    loop: start=0, step=1, limit=4
    $region2: #{tpu_custom_call.1} parent=1 // loop_pre_header
      _
    $region3: #{tpu_custom_call.1} parent=1 // loop_header
      %s14 = sphi 0, %s18
      %p15 = scmp.ge.s32.totalorder %s14, 4
      %s24 = sphi 0, %s26
      %s27 = sphi 0, %s24
      %s28 = sphi 0, %s27
      %s44 = sphi 0, %s28
      %s50 = sphi 0, %s52
      %s53 = sphi 0, %s50
      %s54 = sphi 0, %s53
      %s70 = sphi 0, %s54
      %s74 = sphi 0, %s74
      %s76 = sphi 0, %s74
      %s77 = sphi 0, %s76
      %s91 = sphi 0, %s77
      %s97 = sphi 0, %s99
      %s100 = sphi 0, %s97
      %s101 = sphi 0, %s100
      %s117 = sphi 0, %s101
    $region4: #{tpu_custom_call.1} parent=1 // loop_header_branch
      %17 = sbr.rel (%p15) target = $region8
    $region5: #{tpu_custom_call.1} parent=1 // loop_body
      %s19 = ssub.s32 %s14, 1
      %s20 = ssub.s32 %s14, 2
      %s21 = sadd.s32 %s14, 1
      %s22 = ssub.s32 %s14, %s21
      %p23 = scmp.eq.s32.totalorder %s22, 0
      %s25 = sadd.s32 %s24, 1
      %s26 = scalar_select %p23, %s24, %s25
      %p29 = pneg %p23
      %p30 = scmp.eq.s32.totalorder %s14, 1
      %p31 = por %p29, %p30
      %p32 = scmp.ne.s32.totalorder %s24, %s27
      %p33 = scmp.eq.s32.totalorder %s14, 0
      %p34 = por %p32, %p33
      %p35 = scmp.ne.s32.totalorder %s24, %s27
      %p36 = scmp.eq.s32.totalorder %s19, 1
      %p37 = por %p35, %p36
      %p38 = scmp.ne.s32.totalorder %s27, %s28
      %p39 = scmp.eq.s32.totalorder %s19, 0
      %p40 = por %p38, %p39
      %p41 = scmp.ne.s32.totalorder %s27, %s28
      %p42 = scmp.eq.s32.totalorder %s20, 1
      %p43 = por %p41, %p42
      %p45 = scmp.ne.s32.totalorder %s28, %s44
      %p46 = scmp.eq.s32.totalorder %s20, 0
      %p47 = por %p45, %p46
      %s48 = ssub.s32 %s14, %s21
      %p49 = scmp.eq.s32.totalorder %s48, 0
      %s51 = sadd.s32 %s50, 1
      %s52 = scalar_select %p49, %s50, %s51
      %p55 = pneg %p49
      %p56 = scmp.eq.s32.totalorder %s14, 1
      %p57 = por %p55, %p56
      %p58 = scmp.ne.s32.totalorder %s50, %s53
      %p59 = scmp.eq.s32.totalorder %s14, 0
      %p60 = por %p58, %p59
      %p61 = scmp.ne.s32.totalorder %s50, %s53
      %p62 = scmp.eq.s32.totalorder %s19, 1
      %p63 = por %p61, %p62
      %p64 = scmp.ne.s32.totalorder %s53, %s54
      %p65 = scmp.eq.s32.totalorder %s19, 0
      %p66 = por %p64, %p65
      %p67 = scmp.ne.s32.totalorder %s53, %s54
      %p68 = scmp.eq.s32.totalorder %s20, 1
      %p69 = por %p67, %p68
      %p71 = scmp.ne.s32.totalorder %s54, %s70
      %p72 = scmp.eq.s32.totalorder %s20, 0
      %p73 = por %p71, %p72
      %s75 = sadd.s32 %s74, 1
      %p78 = scmp.eq.s32.totalorder %s14, 1
      %p79 = scmp.ne.s32.totalorder %s74, %s76
      %p80 = scmp.eq.s32.totalorder %s14, 0
      %p81 = por %p79, %p80
      %p82 = scmp.ne.s32.totalorder %s74, %s76
      %p83 = scmp.eq.s32.totalorder %s19, 1
      %p84 = por %p82, %p83
      %p85 = scmp.ne.s32.totalorder %s76, %s77
      %p86 = scmp.eq.s32.totalorder %s19, 0
      %p87 = por %p85, %p86
      %p88 = scmp.ne.s32.totalorder %s76, %s77
      %p89 = scmp.eq.s32.totalorder %s20, 1
      %p90 = por %p88, %p89
      %p92 = scmp.ne.s32.totalorder %s77, %s91
      %p93 = scmp.eq.s32.totalorder %s20, 0
      %p94 = por %p92, %p93
      %s95 = ssub.s32 %s14, %s21
      %p96 = scmp.eq.s32.totalorder %s95, 0
      %s98 = sadd.s32 %s97, 1
      %s99 = scalar_select %p96, %s97, %s98
      %p102 = pneg %p96
      %p103 = scmp.eq.s32.totalorder %s14, 1
      %p104 = por %p102, %p103
      %p105 = scmp.ne.s32.totalorder %s97, %s100
      %p106 = scmp.eq.s32.totalorder %s14, 0
      %p107 = por %p105, %p106
      %p108 = scmp.ne.s32.totalorder %s97, %s100
      %p109 = scmp.eq.s32.totalorder %s19, 1
      %p110 = por %p108, %p109
      %p111 = scmp.ne.s32.totalorder %s100, %s101
      %p112 = scmp.eq.s32.totalorder %s19, 0
      %p113 = por %p111, %p112
      %p114 = scmp.ne.s32.totalorder %s100, %s101
      %p115 = scmp.eq.s32.totalorder %s20, 1
      %p116 = por %p114, %p115
      %p118 = scmp.ne.s32.totalorder %s101, %s117
      %p119 = scmp.eq.s32.totalorder %s20, 0
      %p120 = por %p118, %p119
      %p121 = scmp.le.s32.totalorder 1, %s14
      %p122 = scmp.lt.s32.totalorder %s14, 3
      %p123 = pnand %p121, %p122
      %p124 = pneg %p123
      // Predicated region
      $region9: #{tpu_custom_call.1} parent=5 // pred_check
        _
      $region10: #{tpu_custom_call.1} parent=5 // pred_check_branch
        %126 = sbr.rel (%p123) target = $region12
      $region11: #{tpu_custom_call.1} parent=5 // pred_region
        %s127 = ssub.s32 %s14, 1
        // Predicated region
        $region13: #{tpu_custom_call.1} parent=11 // pred_check
          %p128 = pneg %p87
        $region14: #{tpu_custom_call.1} parent=11 // pred_check_branch
          %130 = sbr.rel (%p128) target = $region16
        $region15: #{tpu_custom_call.1} parent=11 // pred_region
          _
        $region16: #{tpu_custom_call.1} parent=11 // pred_fallthru
          _
      $region12: #{tpu_custom_call.1} parent=5 // pred_fallthru
        _
      %p131 = scmp.lt.s32.totalorder %s14, 2
      // Predicated region
      $region17: #{tpu_custom_call.1} parent=5 // pred_check
        %p132 = pneg %p131
      $region18: #{tpu_custom_call.1} parent=5 // pred_check_branch
        %134 = sbr.rel (%p132) target = $region20
      $region19: #{tpu_custom_call.1} parent=5 // pred_region
        // Predicated region
        $region21: #{tpu_custom_call.1} parent=19 // pred_check
          %p135 = pneg %p34
        $region22: #{tpu_custom_call.1} parent=19 // pred_check_branch
          %137 = sbr.rel (%p135) target = $region24
        $region23: #{tpu_custom_call.1} parent=19 // pred_region
          %s138 = smul.u32 8, %s14
          %s139 = ssub.s32 9, %s138
          %p140 = scmp.lt.s32.totalorder %s139, 8
          %s141 = scalar_select %p140, %s139, 8
          %s142 = smul.u32 8, %s141
          %p143 = scmp.lt.s32.totalorder %s138, 8
          %s144 = scalar_select %p143, %s138, 8
          %s145 = smul.addr %s144, 8
          %s146 = scalar_lea.vmem %s1, %s145
          %s147 = smul.u32 8, %s14
          %s148 = ssub.s32 9, %s147
          %p149 = scmp.lt.s32.totalorder %s148, 8
          %s150 = scalar_select %p149, %s148, 8
          %s151 = smul.u32 8, %s150
        $region24: #{tpu_custom_call.1} parent=19 // pred_fallthru
          _
        // Predicated region
        $region25: #{tpu_custom_call.1} parent=19 // pred_check
          %p152 = pneg %p60
        $region26: #{tpu_custom_call.1} parent=19 // pred_check_branch
          %154 = sbr.rel (%p152) target = $region28
        $region27: #{tpu_custom_call.1} parent=19 // pred_region
          %s155 = smul.u32 8, %s14
          %s156 = ssub.s32 9, %s155
          %p157 = scmp.lt.s32.totalorder %s156, 8
          %s158 = scalar_select %p157, %s156, 8
          %s159 = smul.u32 8, %s158
          %p160 = scmp.lt.s32.totalorder %s155, 8
          %s161 = scalar_select %p160, %s155, 8
          %s162 = smul.addr %s161, 8
          %s163 = scalar_lea.vmem %s2, %s162
          %s164 = smul.u32 8, %s14
          %s165 = ssub.s32 9, %s164
          %p166 = scmp.lt.s32.totalorder %s165, 8
          %s167 = scalar_select %p166, %s165, 8
          %s168 = smul.u32 8, %s167
        $region28: #{tpu_custom_call.1} parent=19 // pred_fallthru
          _
      $region20: #{tpu_custom_call.1} parent=5 // pred_fallthru
        _
      %p169 = scmp.le.s32.totalorder 1, %s14
      %p170 = scmp.lt.s32.totalorder %s14, 3
      %p171 = pnand %p169, %p170
      %p172 = pneg %p171
      // Predicated region
      $region29: #{tpu_custom_call.1} parent=5 // pred_check
        _
      $region30: #{tpu_custom_call.1} parent=5 // pred_check_branch
        %174 = sbr.rel (%p171) target = $region32
      $region31: #{tpu_custom_call.1} parent=5 // pred_region
        %s175 = ssub.s32 %s14, 1
        %s176 = smul.u32 8, %s19
        %s177 = ssub.s32 9, %s176
        %p178 = scmp.lt.s32.totalorder %s177, 8
        %s179 = scalar_select %p178, %s177, 8
        %s180 = smul.u32 8, %s179
        %p181 = scmp.lt.s32.totalorder %s176, 8
        %s182 = scalar_select %p181, %s176, 8
        %s183 = smul.addr %s182, 8
        %s184 = scalar_lea.vmem %s1, %s183
        %p185 = pneg %p40
        %p186 = pneg %p37
        %s187 = smul.u32 8, %s19
        %s188 = ssub.s32 9, %s187
        %p189 = scmp.lt.s32.totalorder %s188, 8
        %s190 = scalar_select %p189, %s188, 8
        %s191 = smul.u32 8, %s190
        %p192 = scmp.lt.s32.totalorder %s187, 8
        %s193 = scalar_select %p192, %s187, 8
        %s194 = smul.addr %s193, 8
        %s195 = scalar_lea.vmem %s2, %s194
        %p196 = pneg %p66
        %p197 = pneg %p63
        %p198 = pneg %p87
        %p199 = pneg %p84
        %p200 = pneg %p113
        %p201 = pneg %p110
        %s202 = sand.u32 %s100, 1
        %s203 = scalar_lea.sflag [#allocation5], %s202
        %s204 = sand.u32 %s100, 1
        %s205 = smul.addr %s204, 8
        %s206 = scalar_lea.vmem [#allocation4], %s205
        %s207 = smul.u32 8, %s19
        %s208 = ssub.s32 9, %s207
        %p209 = scmp.lt.s32.totalorder %s208, 8
        %s210 = scalar_select %p209, %s208, 8
        %s211 = smul.u32 8, %s210
        %p212 = scmp.lt.s32.totalorder %s207, 8
        %s213 = scalar_select %p212, %s207, 8
        %s214 = smul.addr %s213, 8
        %s215 = scalar_lea.vmem %s1, %s214
        %s216 = smul.u32 8, %s19
        %s217 = ssub.s32 9, %s216
        %p218 = scmp.lt.s32.totalorder %s217, 8
        %s219 = scalar_select %p218, %s217, 8
        %s220 = smul.u32 8, %s219
        %s221 = smul.u32 8, %s19
        %s222 = ssub.s32 9, %s221
        %p223 = scmp.lt.s32.totalorder %s222, 8
        %s224 = scalar_select %p223, %s222, 8
        %s225 = smul.u32 8, %s224
        %p226 = scmp.lt.s32.totalorder %s221, 8
        %s227 = scalar_select %p226, %s221, 8
        %s228 = smul.addr %s227, 8
        %s229 = scalar_lea.vmem %s2, %s228
        %s230 = smul.u32 8, %s19
        %s231 = ssub.s32 9, %s230
        %p232 = scmp.lt.s32.totalorder %s231, 8
        %s233 = scalar_select %p232, %s231, 8
        %s234 = smul.u32 8, %s233
        %v235 = vld [vmem:[%s215] sm:$0xff]
        %v236 = vld [vmem:[%s215 + $0x8] sm:$0xff]
        %v237 = vld [vmem:[%s215 + $0x10] sm:$0xff]
        %v238 = vld [vmem:[%s215 + $0x18] sm:$0xff]
        %v239 = vld [vmem:[%s215 + $0x20] sm:$0xff]
        %v240 = vld [vmem:[%s215 + $0x28] sm:$0xff]
        %v241 = vld [vmem:[%s215 + $0x30] sm:$0xff]
        %v242 = vld [vmem:[%s215 + $0x38] sm:$0xff]
        %v243 = vld [vmem:[%s229] sm:$0xff]
        %v244 = vld [vmem:[%s229 + $0x8] sm:$0xff]
        %v245 = vld [vmem:[%s229 + $0x10] sm:$0xff]
        %v246 = vld [vmem:[%s229 + $0x18] sm:$0xff]
        %v247 = vld [vmem:[%s229 + $0x20] sm:$0xff]
        %v248 = vld [vmem:[%s229 + $0x28] sm:$0xff]
        %v249 = vld [vmem:[%s229 + $0x30] sm:$0xff]
        %v250 = vld [vmem:[%s229 + $0x38] sm:$0xff]
        %v251 = vld [vmem:[%s3] sm:$0x1]
        %v252 = vlaneseq
        %v253 = vand.u32 %v252, 127
        %254 = vset.pattern.permute.xlu0 0
        %255 = vperm.xlu0 %254, %v243
        %v256 = vpop.permute.xlu0 %255
        %257 = vset.pattern.permute.xlu0 0
        %258 = vperm.xlu0 %257, %v244
        %v259 = vpop.permute.xlu0 %258
        %260 = vset.pattern.permute.xlu0 0
        %261 = vperm.xlu0 %260, %v245
        %v262 = vpop.permute.xlu0 %261
        %263 = vset.pattern.permute.xlu0 0
        %264 = vperm.xlu0 %263, %v246
        %v265 = vpop.permute.xlu0 %264
        %266 = vset.pattern.permute.xlu0 0
        %267 = vperm.xlu0 %266, %v247
        %v268 = vpop.permute.xlu0 %267
        %269 = vset.pattern.permute.xlu0 0
        %270 = vperm.xlu0 %269, %v248
        %v271 = vpop.permute.xlu0 %270
        %272 = vset.pattern.permute.xlu0 0
        %273 = vperm.xlu0 %272, %v249
        %v274 = vpop.permute.xlu0 %273
        %275 = vset.pattern.permute.xlu0 0
        %276 = vperm.xlu0 %275, %v250
        %v277 = vpop.permute.xlu0 %276
        %vm278 = vcmp.eq.s32.totalorder %v253, %v256
        %vm279 = vcmp.eq.s32.totalorder %v253, %v259
        %vm280 = vcmp.eq.s32.totalorder %v253, %v262
        %vm281 = vcmp.eq.s32.totalorder %v253, %v265
        %vm282 = vcmp.eq.s32.totalorder %v253, %v268
        %vm283 = vcmp.eq.s32.totalorder %v253, %v271
        %vm284 = vcmp.eq.s32.totalorder %v253, %v274
        %vm285 = vcmp.eq.s32.totalorder %v253, %v277
        %v286 = vsel %vm278, 1, 0
        %v287 = vsel %vm279, 1, 0
        %v288 = vsel %vm280, 1, 0
        %v289 = vsel %vm281, 1, 0
        %v290 = vsel %vm282, 1, 0
        %v291 = vsel %vm283, 1, 0
        %v292 = vsel %vm284, 1, 0
        %v293 = vsel %vm285, 1, 0
        %v294 = vcvt.s32.f32 %v286
        %v295 = vcvt.s32.f32 %v287
        %v296 = vcvt.s32.f32 %v288
        %v297 = vcvt.s32.f32 %v289
        %v298 = vcvt.s32.f32 %v290
        %v299 = vcvt.s32.f32 %v291
        %v300 = vcvt.s32.f32 %v292
        %v301 = vcvt.s32.f32 %v293
        %v302 = vmul.f32 %v235, %v294
        %v303 = vmul.f32 %v236, %v295
        %v304 = vmul.f32 %v237, %v296
        %v305 = vmul.f32 %v238, %v297
        %v306 = vmul.f32 %v239, %v298
        %v307 = vmul.f32 %v240, %v299
        %v308 = vmul.f32 %v241, %v300
        %v309 = vmul.f32 %v242, %v301
        %vm310 = vcmask 130048
        %v311 = vsel %vm310, %v302, 0.0
        %312 = vadd.xlane.f32.xlu0 %v311
        %v313 = vpop.xlane.xlu0 %312
        %v314 = vsel %vm310, %v303, 0.0
        %315 = vadd.xlane.f32.xlu0 %v314
        %v316 = vpop.xlane.xlu0 %315
        %v317 = vsel %vm310, %v304, 0.0
        %318 = vadd.xlane.f32.xlu0 %v317
        %v319 = vpop.xlane.xlu0 %318
        %v320 = vsel %vm310, %v305, 0.0
        %321 = vadd.xlane.f32.xlu0 %v320
        %v322 = vpop.xlane.xlu0 %321
        %v323 = vsel %vm310, %v306, 0.0
        %324 = vadd.xlane.f32.xlu0 %v323
        %v325 = vpop.xlane.xlu0 %324
        %v326 = vsel %vm310, %v307, 0.0
        %327 = vadd.xlane.f32.xlu0 %v326
        %v328 = vpop.xlane.xlu0 %327
        %v329 = vsel %vm310, %v308, 0.0
        %330 = vadd.xlane.f32.xlu0 %v329
        %v331 = vpop.xlane.xlu0 %330
        %v332 = vsel %vm310, %v309, 0.0
        %333 = vadd.xlane.f32.xlu0 %v332
        %v334 = vpop.xlane.xlu0 %333
        %v336 = vperm.slane %v251, 0
        %v338 = vmul.f32 %v336, %v294
        %v339 = vmul.f32 %v336, %v295
        %v340 = vmul.f32 %v336, %v296
        %v341 = vmul.f32 %v336, %v297
        %v342 = vmul.f32 %v336, %v298
        %v343 = vmul.f32 %v336, %v299
        %v344 = vmul.f32 %v336, %v300
        %v345 = vmul.f32 %v336, %v301
        %v346 = vsel %vm310, %v338, 0.0
        %347 = vadd.xlane.f32.xlu0 %v346
        %v348 = vpop.xlane.xlu0 %347
        %v349 = vsel %vm310, %v339, 0.0
        %350 = vadd.xlane.f32.xlu0 %v349
        %v351 = vpop.xlane.xlu0 %350
        %v352 = vsel %vm310, %v340, 0.0
        %353 = vadd.xlane.f32.xlu0 %v352
        %v354 = vpop.xlane.xlu0 %353
        %v355 = vsel %vm310, %v341, 0.0
        %356 = vadd.xlane.f32.xlu0 %v355
        %v357 = vpop.xlane.xlu0 %356
        %v358 = vsel %vm310, %v342, 0.0
        %359 = vadd.xlane.f32.xlu0 %v358
        %v360 = vpop.xlane.xlu0 %359
        %v361 = vsel %vm310, %v343, 0.0
        %362 = vadd.xlane.f32.xlu0 %v361
        %v363 = vpop.xlane.xlu0 %362
        %v364 = vsel %vm310, %v344, 0.0
        %365 = vadd.xlane.f32.xlu0 %v364
        %v366 = vpop.xlane.xlu0 %365
        %v367 = vsel %vm310, %v345, 0.0
        %368 = vadd.xlane.f32.xlu0 %v367
        %v369 = vpop.xlane.xlu0 %368
        %v370 = vsel %vm310, %v235, -inf
        %371 = vmax.xlane.f32.xlu0 %v370
        %v372 = vpop.xlane.xlu0 %371
        %v373 = vsel %vm310, %v236, -inf
        %374 = vmax.xlane.f32.xlu0 %v373
        %v375 = vpop.xlane.xlu0 %374
        %v376 = vsel %vm310, %v237, -inf
        %377 = vmax.xlane.f32.xlu0 %v376
        %v378 = vpop.xlane.xlu0 %377
        %v379 = vsel %vm310, %v238, -inf
        %380 = vmax.xlane.f32.xlu0 %v379
        %v381 = vpop.xlane.xlu0 %380
        %v382 = vsel %vm310, %v239, -inf
        %383 = vmax.xlane.f32.xlu0 %v382
        %v384 = vpop.xlane.xlu0 %383
        %v385 = vsel %vm310, %v240, -inf
        %386 = vmax.xlane.f32.xlu0 %v385
        %v387 = vpop.xlane.xlu0 %386
        %v388 = vsel %vm310, %v241, -inf
        %389 = vmax.xlane.f32.xlu0 %v388
        %v390 = vpop.xlane.xlu0 %389
        %v391 = vsel %vm310, %v242, -inf
        %392 = vmax.xlane.f32.xlu0 %v391
        %v393 = vpop.xlane.xlu0 %392
        %v394 = vsub.f32 %v235, %v372
        %v395 = vsub.f32 %v236, %v375
        %v396 = vsub.f32 %v237, %v378
        %v397 = vsub.f32 %v238, %v381
        %v398 = vsub.f32 %v239, %v384
        %v399 = vsub.f32 %v240, %v387
        %v400 = vsub.f32 %v241, %v390
        %v401 = vsub.f32 %v242, %v393
        %v402 = vmul.f32 %v394, 1.442695
        %v403 = vpow.pop %v402
        %v404 = vmul.f32 %v395, 1.442695
        %v405 = vpow.pop %v404
        %v406 = vmul.f32 %v396, 1.442695
        %v407 = vpow.pop %v406
        %v408 = vmul.f32 %v397, 1.442695
        %v409 = vpow.pop %v408
        %v410 = vmul.f32 %v398, 1.442695
        %v411 = vpow.pop %v410
        %v412 = vmul.f32 %v399, 1.442695
        %v413 = vpow.pop %v412
        %v414 = vmul.f32 %v400, 1.442695
        %v415 = vpow.pop %v414
        %v416 = vmul.f32 %v401, 1.442695
        %v417 = vpow.pop %v416
        %v418 = vsel %vm310, %v403, 0.0
        %419 = vadd.xlane.f32.xlu0 %v418
        %v420 = vpop.xlane.xlu0 %419
        %v421 = vsel %vm310, %v405, 0.0
        %422 = vadd.xlane.f32.xlu0 %v421
        %v423 = vpop.xlane.xlu0 %422
        %v424 = vsel %vm310, %v407, 0.0
        %425 = vadd.xlane.f32.xlu0 %v424
        %v426 = vpop.xlane.xlu0 %425
        %v427 = vsel %vm310, %v409, 0.0
        %428 = vadd.xlane.f32.xlu0 %v427
        %v429 = vpop.xlane.xlu0 %428
        %v430 = vsel %vm310, %v411, 0.0
        %431 = vadd.xlane.f32.xlu0 %v430
        %v432 = vpop.xlane.xlu0 %431
        %v433 = vsel %vm310, %v413, 0.0
        %434 = vadd.xlane.f32.xlu0 %v433
        %v435 = vpop.xlane.xlu0 %434
        %v436 = vsel %vm310, %v415, 0.0
        %437 = vadd.xlane.f32.xlu0 %v436
        %v438 = vpop.xlane.xlu0 %437
        %v439 = vsel %vm310, %v417, 0.0
        %440 = vadd.xlane.f32.xlu0 %v439
        %v441 = vpop.xlane.xlu0 %440
        %v442 = vlog2.pop %v420
        %v443 = vmul.f32 %v442, 0.6931472
        %v444 = vlog2.pop %v423
        %v445 = vmul.f32 %v444, 0.6931472
        %v446 = vlog2.pop %v426
        %v447 = vmul.f32 %v446, 0.6931472
        %v448 = vlog2.pop %v429
        %v449 = vmul.f32 %v448, 0.6931472
        %v450 = vlog2.pop %v432
        %v451 = vmul.f32 %v450, 0.6931472
        %v452 = vlog2.pop %v435
        %v453 = vmul.f32 %v452, 0.6931472
        %v454 = vlog2.pop %v438
        %v455 = vmul.f32 %v454, 0.6931472
        %v456 = vlog2.pop %v441
        %v457 = vmul.f32 %v456, 0.6931472
        %v458 = vadd.f32 %v372, %v443
        %v459 = vadd.f32 %v375, %v445
        %v460 = vadd.f32 %v378, %v447
        %v461 = vadd.f32 %v381, %v449
        %v462 = vadd.f32 %v384, %v451
        %v463 = vadd.f32 %v387, %v453
        %v464 = vadd.f32 %v390, %v455
        %v465 = vadd.f32 %v393, %v457
        %v466 = vsub.f32 %v313, %v458
        %v467 = vsub.f32 %v316, %v459
        %v468 = vsub.f32 %v319, %v460
        %v469 = vsub.f32 %v322, %v461
        %v470 = vsub.f32 %v325, %v462
        %v471 = vsub.f32 %v328, %v463
        %v472 = vsub.f32 %v331, %v464
        %v473 = vsub.f32 %v334, %v465
        %v474 = vmul.f32 %v466, 1.442695
        %v475 = vpow.pop %v474
        %v476 = vmul.f32 %v467, 1.442695
        %v477 = vpow.pop %v476
        %v478 = vmul.f32 %v468, 1.442695
        %v479 = vpow.pop %v478
        %v480 = vmul.f32 %v469, 1.442695
        %v481 = vpow.pop %v480
        %v482 = vmul.f32 %v470, 1.442695
        %v483 = vpow.pop %v482
        %v484 = vmul.f32 %v471, 1.442695
        %v485 = vpow.pop %v484
        %v486 = vmul.f32 %v472, 1.442695
        %v487 = vpow.pop %v486
        %v488 = vmul.f32 %v473, 1.442695
        %v489 = vpow.pop %v488
        %v490 = vsub.f32 1.0, %v475
        %v491 = vsub.f32 1.0, %v477
        %v492 = vsub.f32 1.0, %v479
        %v493 = vsub.f32 1.0, %v481
        %v494 = vsub.f32 1.0, %v483
        %v495 = vsub.f32 1.0, %v485
        %v496 = vsub.f32 1.0, %v487
        %v497 = vsub.f32 1.0, %v489
        %v498 = vmax.f32 %v490, 0.0
        %v499 = vmax.f32 %v491, 0.0
        %v500 = vmax.f32 %v492, 0.0
        %v501 = vmax.f32 %v493, 0.0
        %v502 = vmax.f32 %v494, 0.0
        %v503 = vmax.f32 %v495, 0.0
        %v504 = vmax.f32 %v496, 0.0
        %v505 = vmax.f32 %v497, 0.0
        %v506 = vmul.f32 %v498, %v498
        %v507 = vmul.f32 %v499, %v499
        %v508 = vmul.f32 %v500, %v500
        %v509 = vmul.f32 %v501, %v501
        %v510 = vmul.f32 %v502, %v502
        %v511 = vmul.f32 %v503, %v503
        %v512 = vmul.f32 %v504, %v504
        %v513 = vmul.f32 %v505, %v505
        %v514 = vsub.f32 0.0, %v348
        %v515 = vsub.f32 0.0, %v351
        %v516 = vsub.f32 0.0, %v354
        %v517 = vsub.f32 0.0, %v357
        %v518 = vsub.f32 0.0, %v360
        %v519 = vsub.f32 0.0, %v363
        %v520 = vsub.f32 0.0, %v366
        %v521 = vsub.f32 0.0, %v369
        %v522 = vmul.f32 %v514, %v506
        %v523 = vmul.f32 %v515, %v507
        %v524 = vmul.f32 %v516, %v508
        %v525 = vmul.f32 %v517, %v509
        %v526 = vmul.f32 %v518, %v510
        %v527 = vmul.f32 %v519, %v511
        %v528 = vmul.f32 %v520, %v512
        %v529 = vmul.f32 %v521, %v513
        %v530 = vmul.f32 %v522, %v466
        %v531 = vmul.f32 %v523, %v467
        %v532 = vmul.f32 %v524, %v468
        %v533 = vmul.f32 %v525, %v469
        %v534 = vmul.f32 %v526, %v470
        %v535 = vmul.f32 %v527, %v471
        %v536 = vmul.f32 %v528, %v472
        %v537 = vmul.f32 %v529, %v473
        %v538 = vlaneseq
        %v539 = vshrl.u32 %v538, 7
        %v540 = vadd.s32 %v539, 8
        %v541 = vadd.s32 %v539, 16
        %v542 = vadd.s32 %v539, 24
        %v543 = vadd.s32 %v539, 32
        %v544 = vadd.s32 %v539, 40
        %v545 = vadd.s32 %v539, 48
        %v546 = vadd.s32 %v539, 56
        %s547 = smul.u32 %s19, 64
        %v548 = vstv %s547
        %v549 = vadd.s32 %v548, %v539
        %v550 = vadd.s32 %v548, %v540
        %v551 = vadd.s32 %v548, %v541
        %v552 = vadd.s32 %v548, %v542
        %v553 = vadd.s32 %v548, %v543
        %v554 = vadd.s32 %v548, %v544
        %v555 = vadd.s32 %v548, %v545
        %v556 = vadd.s32 %v548, %v546
        %s557 = sld [smem:[#allocation3]]
        %v558 = vstv %s557
        %vm559 = vcmp.lt.s32.totalorder %v549, %v558
        %vm560 = vcmp.lt.s32.totalorder %v550, %v558
        %vm561 = vcmp.lt.s32.totalorder %v551, %v558
        %vm562 = vcmp.lt.s32.totalorder %v552, %v558
        %vm563 = vcmp.lt.s32.totalorder %v553, %v558
        %vm564 = vcmp.lt.s32.totalorder %v554, %v558
        %vm565 = vcmp.lt.s32.totalorder %v555, %v558
        %vm566 = vcmp.lt.s32.totalorder %v556, %v558
        %v567 = vsel %vm559, %v530, 0.0
        %v568 = vsel %vm560, %v531, 0.0
        %v569 = vsel %vm561, %v532, 0.0
        %v570 = vsel %vm562, %v533, 0.0
        %v571 = vsel %vm563, %v534, 0.0
        %v572 = vsel %vm564, %v535, 0.0
        %v573 = vsel %vm565, %v536, 0.0
        %v574 = vsel %vm566, %v537, 0.0
        %vm575 = vcmask 7168
        %v576 = vsel %vm575, %v567, 0.0
        %v577 = vsel %vm575, %v568, 0.0
        %v578 = vadd.f32 %v576, %v577
        %v579 = vsel %vm575, %v569, 0.0
        %v580 = vadd.f32 %v578, %v579
        %v581 = vsel %vm575, %v570, 0.0
        %v582 = vadd.f32 %v580, %v581
        %v583 = vsel %vm575, %v571, 0.0
        %v584 = vadd.f32 %v582, %v583
        %v585 = vsel %vm575, %v572, 0.0
        %v586 = vadd.f32 %v584, %v585
        %v587 = vsel %vm575, %v573, 0.0
        %v588 = vadd.f32 %v586, %v587
        %v589 = vsel %vm575, %v574, 0.0
        %v590 = vadd.f32 %v588, %v589
        %591 = vadd.xlane.f32.xlu0 %v590
        %v592 = vpop.xlane.xlu0 %591
        %v593 = vrot.slane %v592, 4
        %v594 = vadd.f32 %v592, %v593
        %v595 = vrot.slane %v594, 2
        %v596 = vadd.f32 %v594, %v595
        %v597 = vrot.slane %v596, 1
        %v598 = vadd.f32 %v596, %v597
        %s599 = vtos %v598
        %v600 = vstv %s599
        %601 = vst [vmem:[%s206] sm:$0xff] %v600
        %s602 = sand.u32 %s100, 1
        %s603 = scalar_lea.sflag [#allocation5], %s602
        %s604 = sand.u32 %s100, 1
        %s605 = smul.addr %s604, 8
        %s606 = scalar_lea.vmem [#allocation4], %s605
        // Predicated region
        $region33: #{tpu_custom_call.1} parent=31 // pred_check
          %p607 = pneg %p110
        $region34: #{tpu_custom_call.1} parent=31 // pred_check_branch
          %609 = sbr.rel (%p607) target = $region36
        $region35: #{tpu_custom_call.1} parent=31 // pred_region
          %611 = vsyncadd %s603, 0
          %s612 = smul.addr %s19, 8
          %s613 = scalar_lea.hbm %s4, %s612
          %s615 = sshll.u32 %s606, 4
          %s616 = int_to_ptr.vmem [resolvable:$true] %s615
          %s617 = sshll.u32 %s613, 4
          %s618 = int_to_ptr.hbm [resolvable:$true] %s617
          %620 = dma.vmem_to_hbm [thread:$0]  %s616, 128, %s618, %s603
        $region36: #{tpu_custom_call.1} parent=31 // pred_fallthru
          _
      $region32: #{tpu_custom_call.1} parent=5 // pred_fallthru
        _
      %p621 = scmp.le.s32.totalorder 2, %s14
      // Predicated region
      $region37: #{tpu_custom_call.1} parent=5 // pred_check
        %p622 = pneg %p621
      $region38: #{tpu_custom_call.1} parent=5 // pred_check_branch
        %624 = sbr.rel (%p622) target = $region40
      $region39: #{tpu_custom_call.1} parent=5 // pred_region
        %s625 = ssub.s32 %s14, 2
        // Predicated region
        $region41: #{tpu_custom_call.1} parent=39 // pred_check
          %p626 = pneg %p116
        $region42: #{tpu_custom_call.1} parent=39 // pred_check_branch
          %628 = sbr.rel (%p626) target = $region44
        $region43: #{tpu_custom_call.1} parent=39 // pred_region
          %s629 = sand.u32 %s101, 1
          %s630 = scalar_lea.sflag [#allocation5], %s629
          %s631 = sand.u32 %s101, 1
          %s632 = smul.addr %s631, 8
          %s633 = scalar_lea.vmem [#allocation4], %s632
          %635 = dma.done %s630, 128
        $region44: #{tpu_custom_call.1} parent=39 // pred_fallthru
          _
      $region40: #{tpu_custom_call.1} parent=5 // pred_fallthru
        _
    $region6: #{tpu_custom_call.1} parent=1 // loop_footer
      %s18 = sadd.s32 1, %s14
    $region7: #{tpu_custom_call.1} parent=1 // loop_footer_branch
      %13 = sbr.rel target = $region3
    $region8: #{tpu_custom_call.1} parent=1 // loop_exit
      _
    %636 = vsyncpa [#allocation5], 1
    %s637 = scalar_lea.sflag [#allocation5], 1
    %638 = vsyncpa %s637, 1

</llo_original>
